<compile_context>
chip_gen: v7x
topology: tpu7x:2x2x1
jax: 0.10.0
libtpu: 0.0.40
codegen_flags: <defaults>
</compile_context>

<pallas_src>
import functools

import jax
import jax.numpy as jnp
from jax import lax
from jax.experimental import pallas as pl
from jax.experimental.pallas import tpu as pltpu


def _head_kernel(x_ref, w_ref, b_ref, o_ref):
    # x_ref: (1, C, thw)    NCHW slab (channels x pixels) -- no wrapper transpose
    # w_ref: (C, OCp)       fused [cls|box|landm] weights, zero-padded to 128 lanes
    # b_ref: (1, OCp)       fused bias, zero-padded
    # o_ref: (1, thw, OCp)  lane-dense (128-wide) output tile
    x_blk = x_ref[0]                                      # (C, thw)
    acc = lax.dot_general(
        x_blk, w_ref[...],
        dimension_numbers=(((0,), (0,)), ((), ())),       # contract channel axis
        preferred_element_type=jnp.float32,
    )                                                     # (thw, OCp)
    o_ref[0] = (acc + b_ref[...]).astype(o_ref.dtype)


def _pick_hw_tile(hw, cap=2048):
    """Largest pixel tile: whole HW if small, else biggest 128-multiple divisor <= cap."""
    if hw <= cap:
        return hw
    best = None
    t = 128
    while t <= cap:
        if hw % t == 0:
            best = t
        t += 128
    return best if best is not None else hw


@functools.partial(jax.jit, static_argnames=("num_anchors",))
def decoupled_head_forward(x_nchw, w_cls, b_cls, w_box, b_box, w_lm, b_lm,
                           num_anchors=5):
    B, C, H, W = x_nchw.shape
    HW = H * W
    x = x_nchw.reshape(B, C, HW)  # free reshape: no transpose, no pad of activations

    # Fuse the three 1x1-conv heads along output channels: [cls | box | landm]
    w = jnp.concatenate([w_cls, w_box, w_lm], axis=1)           # (C, 12A)
    b = jnp.concatenate([b_cls, b_box, b_lm], axis=0)           # (12A,)
    OC = w.shape[1]
    OCp = ((OC + 127) // 128) * 128                             # lane-dense output width
    if OCp != OC:
        w = jnp.pad(w, ((0, 0), (0, OCp - OC)))                 # tiny weight pad only
        b = jnp.pad(b, (0, OCp - OC))
    b = b[None, :]                                              # (1, OCp)

    thw = _pick_hw_tile(HW)
    grid = (B, HW // thw)

    out = pl.pallas_call(
        _head_kernel,
        out_shape=jax.ShapeDtypeStruct((B, HW, OCp), x_nchw.dtype),
        grid=grid,
        in_specs=[
            pl.BlockSpec((1, C, thw), lambda bi, j: (bi, 0, j)),
            pl.BlockSpec((C, OCp), lambda bi, j: (0, 0)),
            pl.BlockSpec((1, OCp), lambda bi, j: (0, 0)),
        ],
        out_specs=pl.BlockSpec((1, thw, OCp), lambda bi, j: (bi, j, 0)),
        compiler_params=pltpu.CompilerParams(
            dimension_semantics=("parallel", "parallel")),
    )(x, w, b)

    # Slice off the zero-padded channels BEFORE the anchor-interleaved views.
    c_cls = 2 * num_anchors
    c_box = 4 * num_anchors
    c_lm = 6 * num_anchors
    cls_pred = out[..., :c_cls].reshape(B, -1, 2)
    box_pred = out[..., c_cls:c_cls + c_box].reshape(B, -1, 4)
    landm_pred = out[..., c_cls + c_box:c_cls + c_box + c_lm].reshape(B, -1, 6)
    return cls_pred, box_pred, landm_pred


def _init_head_params(key, head_dim=48, num_anchors=5, dtype=jnp.float32):
    """Deterministic synthetic init mimicking nn.Conv2d default (uniform +-1/sqrt(fan_in))."""
    bound = 1.0 / (head_dim ** 0.5)
    ks = jax.random.split(key, 6)

    def u(k, shape):
        return jax.random.uniform(k, shape, dtype=dtype, minval=-bound, maxval=bound)

    # 1x1 conv weights stored as (C_in, C_out) (== (C_out, C_in, 1, 1) transposed)
    w_cls = u(ks[0], (head_dim, 2 * num_anchors)); b_cls = u(ks[1], (2 * num_anchors,))
    w_box = u(ks[2], (head_dim, 4 * num_anchors)); b_box = u(ks[3], (4 * num_anchors,))
    w_lm  = u(ks[4], (head_dim, 6 * num_anchors)); b_lm  = u(ks[5], (6 * num_anchors,))
    return w_cls, b_cls, w_box, b_box, w_lm, b_lm


def _reference_forward(x_nchw, w_cls, b_cls, w_box, b_box, w_lm, b_lm, num_anchors=5):
    """Pure-JAX reference matching the PyTorch semantics (1x1 convs + permute + view)."""
    B, C, H, W = x_nchw.shape
    x_nhwc = jnp.transpose(x_nchw, (0, 2, 3, 1))

    def head(w, b, last):
        y = jnp.einsum("bhwc,co->bhwo", x_nhwc, w) + b
        return y.reshape(B, -1, last)

    return (head(w_cls, b_cls, 2), head(w_box, b_box, 4), head(w_lm, b_lm, 6))


if __name__ == "__main__":
    head_dim = 48
    num_anchors = 5
    B, H, W = 2, 16, 16

    key = jax.random.PRNGKey(0)
    kx, kp = jax.random.split(key)
    x = jax.random.normal(kx, (B, head_dim, H, W), dtype=jnp.float32)  # NCHW like PyTorch
    params = _init_head_params(kp, head_dim=head_dim, num_anchors=num_anchors)

    cls_pred, box_pred, landm_pred = decoupled_head_forward(
        x, *params, num_anchors=num_anchors)
    jax.block_until_ready((cls_pred, box_pred, landm_pred))

    # sanity check against a pure-JAX reference
    ref_cls, ref_box, ref_lm = _reference_forward(x, *params, num_anchors=num_anchors)
    assert cls_pred.shape == (B, H * W * num_anchors, 2)
    assert box_pred.shape == (B, H * W * num_anchors, 4)
    assert landm_pred.shape == (B, H * W * num_anchors, 6)
    assert jnp.allclose(cls_pred, ref_cls, atol=1e-5)
    assert jnp.allclose(box_pred, ref_box, atol=1e-5)
    assert jnp.allclose(landm_pred, ref_lm, atol=1e-5)

    print("KERNEL_OK")
</pallas_src>

<mosaic_0001>
module attributes {stable_mosaic.version = 11 : i64} {
  func.func @_head_kernel(%arg0: i32, %arg1: i32, %arg2: memref<1x48x256xf32, #tpu.memory_space<vmem>>, %arg3: memref<48x128xf32, #tpu.memory_space<vmem>>, %arg4: memref<1x128xf32, #tpu.memory_space<vmem>>, %arg5: memref<1x256x128xf32, #tpu.memory_space<vmem>>) attributes {dimension_semantics = [#tpu.dimension_semantics<parallel>, #tpu.dimension_semantics<parallel>], iteration_bounds = array<i64: 2, 1>, scalar_prefetch = 0 : i64, scratch_operands = 0 : i64, tpu.core_type = #tpu.core_type<tc>, window_params = [{transform_indices = @transform_0, window_bounds = array<i64: 1, 48, 256>}, {pipeline_mode = #tpu.pipeline_mode<synchronous>, transform_indices = @transform_1, window_bounds = array<i64: 48, 128>}, {pipeline_mode = #tpu.pipeline_mode<synchronous>, transform_indices = @transform_2, window_bounds = array<i64: 1, 128>}, {transform_indices = @transform_3, window_bounds = array<i64: 1, 256, 128>}]} {
    %c0 = arith.constant 0 : index
    %c0_0 = arith.constant 0 : index
    %c0_1 = arith.constant 0 : index
    %0 = vector.load %arg2[%c0, %c0_0, %c0_1] : memref<1x48x256xf32, #tpu.memory_space<vmem>>, vector<1x48x256xf32>
    %1 = vector.shape_cast %0 : vector<1x48x256xf32> to vector<48x256xf32>
    %c0_2 = arith.constant 0 : index
    %c0_3 = arith.constant 0 : index
    %2 = vector.load %arg3[%c0_2, %c0_3] : memref<48x128xf32, #tpu.memory_space<vmem>>, vector<48x128xf32>
    %cst = arith.constant dense<0.000000e+00> : vector<256x128xf32>
    %3 = tpu.matmul %1, %2, %cst {dimension_numbers = #tpu.dot_dimension_numbers<[0], [0], [1], [1], [0, 1, 1, 1], [], []>} : vector<48x256xf32>, vector<48x128xf32>, vector<256x128xf32> -> vector<256x128xf32>
    %c0_4 = arith.constant 0 : index
    %c0_5 = arith.constant 0 : index
    %4 = vector.load %arg4[%c0_4, %c0_5] : memref<1x128xf32, #tpu.memory_space<vmem>>, vector<1x128xf32>
    %5 = vector.broadcast %4 : vector<1x128xf32> to vector<256x128xf32>
    %6 = arith.addf %3, %5 : vector<256x128xf32>
    %c0_6 = arith.constant 0 : index
    %c0_7 = arith.constant 0 : index
    %c0_8 = arith.constant 0 : index
    %7 = vector.load %arg5[%c0_6, %c0_7, %c0_8] : memref<1x256x128xf32, #tpu.memory_space<vmem>>, vector<1x256x128xf32>
    %8 = vector.shape_cast %7 : vector<1x256x128xf32> to vector<256x128xf32>
    %9 = vector.shape_cast %6 : vector<256x128xf32> to vector<1x256x128xf32>
    tpu.vector_store %arg5[%c0_6, %c0_7, %c0_8], %9 {strides = array<i32>} : memref<1x256x128xf32, #tpu.memory_space<vmem>>, vector<1x256x128xf32>,
    return
  }
  func.func @transform_0(%arg0: i32, %arg1: i32) -> (i32, i32, i32) {
    %c0_i32 = arith.constant 0 : i32
    %c0_i32_0 = arith.constant 0 : i32
    return %arg0, %c0_i32, %arg1 : i32, i32, i32
  }
  func.func @transform_1(%arg0: i32, %arg1: i32) -> (i32, i32) {
    %c0_i32 = arith.constant 0 : i32
    %c0_i32_0 = arith.constant 0 : i32
    %c0_i32_1 = arith.constant 0 : i32
    return %c0_i32, %c0_i32_0 : i32, i32
  }
  func.func @transform_2(%arg0: i32, %arg1: i32) -> (i32, i32) {
    %c0_i32 = arith.constant 0 : i32
    %c0_i32_0 = arith.constant 0 : i32
    %c0_i32_1 = arith.constant 0 : i32
    return %c0_i32, %c0_i32_0 : i32, i32
  }
  func.func @transform_3(%arg0: i32, %arg1: i32) -> (i32, i32, i32) {
    %c0_i32 = arith.constant 0 : i32
    %c0_i32_0 = arith.constant 0 : i32
    return %arg0, %arg1, %c0_i32 : i32, i32, i32
  }
}

</mosaic_0001>

<llo_original>
// kernel: decoupled_head_forward.1
$region0: #{decoupled_head_forward.1}
  #allocation0 [shape = 'u32[]', space=smem, size = 0x4, offset = 0x4, fixed_abs, tag = 'smem constant byte address 0x4 - core index']
  #allocation1 [shape = 'u32[144,128]{1,0:T(1,128)}', space=vmem, size = 0x12000, scoped, tag = 'internal scratch']
  %s0 = inlined_call_operand.vmem [shape: f32[2,48,256], index: 0, kind: input, shape index: {}]
  %s1 = inlined_call_operand.vmem [shape: f32[48,128], index: 1, kind: input, shape index: {}]
  %s2 = inlined_call_operand.vmem [shape: f32[1,128], index: 2, kind: input, shape index: {}]
  %s3 = inlined_call_operand.vmem [shape: f32[2,256,128], index: 3, kind: output, shape index: {}]
  %s4 = sld [smem:[#allocation0]]
  $region45: #{decoupled_head_forward.1} parent=0
    _
  %s6 = ssub.s32 1, %s4
  %s7 = scalar_select 0, %s6, %s4
  loop: start=0, step=1, limit=4
  $region2: #{decoupled_head_forward.1} parent=0 // loop_pre_header
    _
  $region3: #{decoupled_head_forward.1} parent=0 // loop_header
    %s9 = sphi 0, %s13
    %p10 = scmp.ge.s32.totalorder %s9, 4
    %s16 = sphi 0, %s28
    %s17 = sphi 0, %s24
    %s18 = sphi 0, %s16
    %s19 = sphi 0, %s17
    %s20 = sphi 0, %s18
    %s21 = sphi 0, %s19
    %s33 = sphi 0, %s35
    %s36 = sphi 0, %s33
    %s37 = sphi 0, %s36
    %s53 = sphi 0, %s37
    %s57 = sphi 0, %s57
    %s59 = sphi 0, %s57
    %s60 = sphi 0, %s59
    %s74 = sphi 0, %s60
    %s78 = sphi 0, %s78
    %s80 = sphi 0, %s78
    %s81 = sphi 0, %s80
    %s95 = sphi 0, %s81
    %s103 = sphi 0, %s105
    %s106 = sphi 0, %s103
    %s107 = sphi 0, %s106
    %s123 = sphi 0, %s107
  $region4: #{decoupled_head_forward.1} parent=0 // loop_header_branch
    %12 = sbr.rel (%p10) target = $region8
  $region5: #{decoupled_head_forward.1} parent=0 // loop_body
    %s14 = ssub.s32 %s9, 1
    %s15 = ssub.s32 %s9, 2
    %s22 = sadd.s32 1, %s17
    %p23 = scmp.ge.s32.totalorder %s22, 1
    %s24 = scalar_select %p23, 0, %s22
    %s25 = sadd.s32 1, %s16
    %s26 = scalar_select %p23, %s25, %s16
    %p27 = scmp.ge.s32.totalorder %s26, 2
    %s28 = scalar_select %p27, 0, %s26
    %s29 = ssub.s32 %s16, %s28
    %s30 = ssub.s32 %s17, %s24
    %s31 = sor.u32 %s29, %s30
    %p32 = scmp.eq.s32.totalorder %s31, 0
    %s34 = sadd.s32 %s33, 1
    %s35 = scalar_select %p32, %s33, %s34
    %p38 = pneg %p32
    %p39 = scmp.eq.s32.totalorder %s9, 1
    %p40 = por %p38, %p39
    %p41 = scmp.ne.s32.totalorder %s33, %s36
    %p42 = scmp.eq.s32.totalorder %s9, 0
    %p43 = por %p41, %p42
    %p44 = scmp.ne.s32.totalorder %s33, %s36
    %p45 = scmp.eq.s32.totalorder %s14, 1
    %p46 = por %p44, %p45
    %p47 = scmp.ne.s32.totalorder %s36, %s37
    %p48 = scmp.eq.s32.totalorder %s14, 0
    %p49 = por %p47, %p48
    %p50 = scmp.ne.s32.totalorder %s36, %s37
    %p51 = scmp.eq.s32.totalorder %s15, 1
    %p52 = por %p50, %p51
    %p54 = scmp.ne.s32.totalorder %s37, %s53
    %p55 = scmp.eq.s32.totalorder %s15, 0
    %p56 = por %p54, %p55
    %s58 = sadd.s32 %s57, 1
    %p61 = scmp.eq.s32.totalorder %s9, 1
    %p62 = scmp.ne.s32.totalorder %s57, %s59
    %p63 = scmp.eq.s32.totalorder %s9, 0
    %p64 = por %p62, %p63
    %p65 = scmp.ne.s32.totalorder %s57, %s59
    %p66 = scmp.eq.s32.totalorder %s14, 1
    %p67 = por %p65, %p66
    %p68 = scmp.ne.s32.totalorder %s59, %s60
    %p69 = scmp.eq.s32.totalorder %s14, 0
    %p70 = por %p68, %p69
    %p71 = scmp.ne.s32.totalorder %s59, %s60
    %p72 = scmp.eq.s32.totalorder %s15, 1
    %p73 = por %p71, %p72
    %p75 = scmp.ne.s32.totalorder %s60, %s74
    %p76 = scmp.eq.s32.totalorder %s15, 0
    %p77 = por %p75, %p76
    %s79 = sadd.s32 %s78, 1
    %p82 = scmp.eq.s32.totalorder %s9, 1
    %p83 = scmp.ne.s32.totalorder %s78, %s80
    %p84 = scmp.eq.s32.totalorder %s9, 0
    %p85 = por %p83, %p84
    %p86 = scmp.ne.s32.totalorder %s78, %s80
    %p87 = scmp.eq.s32.totalorder %s14, 1
    %p88 = por %p86, %p87
    %p89 = scmp.ne.s32.totalorder %s80, %s81
    %p90 = scmp.eq.s32.totalorder %s14, 0
    %p91 = por %p89, %p90
    %p92 = scmp.ne.s32.totalorder %s80, %s81
    %p93 = scmp.eq.s32.totalorder %s15, 1
    %p94 = por %p92, %p93
    %p96 = scmp.ne.s32.totalorder %s81, %s95
    %p97 = scmp.eq.s32.totalorder %s15, 0
    %p98 = por %p96, %p97
    %s99 = ssub.s32 %s16, %s28
    %s100 = ssub.s32 %s17, %s24
    %s101 = sor.u32 %s99, %s100
    %p102 = scmp.eq.s32.totalorder %s101, 0
    %s104 = sadd.s32 %s103, 1
    %s105 = scalar_select %p102, %s103, %s104
    %p108 = pneg %p102
    %p109 = scmp.eq.s32.totalorder %s9, 1
    %p110 = por %p108, %p109
    %p111 = scmp.ne.s32.totalorder %s103, %s106
    %p112 = scmp.eq.s32.totalorder %s9, 0
    %p113 = por %p111, %p112
    %p114 = scmp.ne.s32.totalorder %s103, %s106
    %p115 = scmp.eq.s32.totalorder %s14, 1
    %p116 = por %p114, %p115
    %p117 = scmp.ne.s32.totalorder %s106, %s107
    %p118 = scmp.eq.s32.totalorder %s14, 0
    %p119 = por %p117, %p118
    %p120 = scmp.ne.s32.totalorder %s106, %s107
    %p121 = scmp.eq.s32.totalorder %s15, 1
    %p122 = por %p120, %p121
    %p124 = scmp.ne.s32.totalorder %s107, %s123
    %p125 = scmp.eq.s32.totalorder %s15, 0
    %p126 = por %p124, %p125
    %p127 = scmp.le.s32.totalorder 1, %s9
    %p128 = scmp.lt.s32.totalorder %s9, 3
    %p129 = pnand %p127, %p128
    %p130 = pneg %p129
    // Predicated region
    $region9: #{decoupled_head_forward.1} parent=5 // pred_check
      _
    $region10: #{decoupled_head_forward.1} parent=5 // pred_check_branch
      %132 = sbr.rel (%p129) target = $region12
    $region11: #{decoupled_head_forward.1} parent=5 // pred_region
      %s133 = ssub.s32 %s9, 1
      // Predicated region
      $region13: #{decoupled_head_forward.1} parent=11 // pred_check
        %p134 = pneg %p70
      $region14: #{decoupled_head_forward.1} parent=11 // pred_check_branch
        %136 = sbr.rel (%p134) target = $region16
      $region15: #{decoupled_head_forward.1} parent=11 // pred_region
        _
      $region16: #{decoupled_head_forward.1} parent=11 // pred_fallthru
        _
      // Predicated region
      $region17: #{decoupled_head_forward.1} parent=11 // pred_check
        %p137 = pneg %p91
      $region18: #{decoupled_head_forward.1} parent=11 // pred_check_branch
        %139 = sbr.rel (%p137) target = $region20
      $region19: #{decoupled_head_forward.1} parent=11 // pred_region
        _
      $region20: #{decoupled_head_forward.1} parent=11 // pred_fallthru
        _
    $region12: #{decoupled_head_forward.1} parent=5 // pred_fallthru
      _
    %p140 = scmp.lt.s32.totalorder %s9, 2
    // Predicated region
    $region21: #{decoupled_head_forward.1} parent=5 // pred_check
      %p141 = pneg %p140
    $region22: #{decoupled_head_forward.1} parent=5 // pred_check_branch
      %143 = sbr.rel (%p141) target = $region24
    $region23: #{decoupled_head_forward.1} parent=5 // pred_region
      // Predicated region
      $region25: #{decoupled_head_forward.1} parent=23 // pred_check
        %p144 = pneg %p43
      $region26: #{decoupled_head_forward.1} parent=23 // pred_check_branch
        %146 = sbr.rel (%p144) target = $region28
      $region27: #{decoupled_head_forward.1} parent=23 // pred_region
        %s147 = smul.u32 2, %s17
        %p148 = scmp.lt.s32.totalorder %s16, 1
        %s149 = scalar_select %p148, %s16, 1
        %p150 = scmp.lt.s32.totalorder %s147, 1
        %s151 = scalar_select %p150, %s147, 1
        %s152 = smul.addr %s149, 12
        %s153 = sadd.s32 %s151, %s152
        %s154 = smul.addr %s153, 8
        %s155 = scalar_lea.vmem %s0, %s154
        %s156 = smul.u32 2, %s17
      $region28: #{decoupled_head_forward.1} parent=23 // pred_fallthru
        _
    $region24: #{decoupled_head_forward.1} parent=5 // pred_fallthru
      _
    %p157 = scmp.le.s32.totalorder 1, %s9
    %p158 = scmp.lt.s32.totalorder %s9, 3
    %p159 = pnand %p157, %p158
    %p160 = pneg %p159
    // Predicated region
    $region29: #{decoupled_head_forward.1} parent=5 // pred_check
      _
    $region30: #{decoupled_head_forward.1} parent=5 // pred_check_branch
      %162 = sbr.rel (%p159) target = $region32
    $region31: #{decoupled_head_forward.1} parent=5 // pred_region
      %s163 = ssub.s32 %s9, 1
      %s164 = smul.u32 2, %s19
      %p165 = scmp.lt.s32.totalorder %s18, 1
      %s166 = scalar_select %p165, %s18, 1
      %p167 = scmp.lt.s32.totalorder %s164, 1
      %s168 = scalar_select %p167, %s164, 1
      %s169 = smul.addr %s166, 12
      %s170 = sadd.s32 %s168, %s169
      %s171 = smul.addr %s170, 8
      %s172 = scalar_lea.vmem %s0, %s171
      %p173 = pneg %p49
      %p174 = pneg %p46
      %p175 = pneg %p70
      %p176 = pneg %p67
      %p177 = pneg %p91
      %p178 = pneg %p88
      %p179 = pneg %p119
      %p180 = pneg %p116
      %s181 = smul.u32 32, %s19
      %p182 = scmp.lt.s32.totalorder %s18, 1
      %s183 = scalar_select %p182, %s18, 1
      %p184 = scmp.lt.s32.totalorder %s181, 31
      %s185 = scalar_select %p184, %s181, 31
      %s186 = smul.addr %s183, 32
      %s187 = sadd.s32 %s185, %s186
      %s188 = smul.addr %s187, 8
      %s189 = scalar_lea.vmem %s3, %s188
      %s190 = smul.u32 2, %s19
      %p191 = scmp.lt.s32.totalorder %s18, 1
      %s192 = scalar_select %p191, %s18, 1
      %p193 = scmp.lt.s32.totalorder %s190, 1
      %s194 = scalar_select %p193, %s190, 1
      %s195 = smul.addr %s192, 12
      %s196 = sadd.s32 %s194, %s195
      %s197 = smul.addr %s196, 8
      %s198 = scalar_lea.vmem %s0, %s197
      %s199 = smul.u32 2, %s19
      %s200 = smul.u32 32, %s19
      %p201 = scmp.lt.s32.totalorder %s18, 1
      %s202 = scalar_select %p201, %s18, 1
      %p203 = scmp.lt.s32.totalorder %s200, 31
      %s204 = scalar_select %p203, %s200, 31
      %s205 = smul.addr %s202, 32
      %s206 = sadd.s32 %s204, %s205
      %s207 = smul.addr %s206, 8
      %s208 = scalar_lea.vmem %s3, %s207
      %s209 = smul.u32 32, %s19
      %v210 = vld [vmem:[%s198] sm:$0xff]
      %v211 = vld [vmem:[%s198 + $0x8] sm:$0xff]
      %v212 = vld [vmem:[%s198 + $0x10] sm:$0xff]
      %v213 = vld [vmem:[%s198 + $0x18] sm:$0xff]
      %v214 = vld [vmem:[%s198 + $0x20] sm:$0xff]
      %v215 = vld [vmem:[%s198 + $0x28] sm:$0xff]
      %v216 = vld [vmem:[%s198 + $0x30] sm:$0xff]
      %v217 = vld [vmem:[%s198 + $0x38] sm:$0xff]
      %v218 = vld [vmem:[%s198 + $0x40] sm:$0xff]
      %v219 = vld [vmem:[%s198 + $0x48] sm:$0xff]
      %v220 = vld [vmem:[%s198 + $0x50] sm:$0xff]
      %v221 = vld [vmem:[%s198 + $0x58] sm:$0xff]
      %v222 = vld [vmem:[%s1] sm:$0xff]
      %v223 = vld [vmem:[%s1 + $0x8] sm:$0xff]
      %v224 = vld [vmem:[%s1 + $0x10] sm:$0xff]
      %v225 = vld [vmem:[%s1 + $0x18] sm:$0xff]
      %v226 = vld [vmem:[%s1 + $0x20] sm:$0xff]
      %v227 = vld [vmem:[%s1 + $0x28] sm:$0xff]
      %v228 = vld [vmem:[%s2] sm:$0x1]
      %v230 = vlaneseq
      %v231 = vshrl.u32 %v230, 7
      %v232 = vsub.s32 0, %v231
      %v233 = vrot.slane %v228, %v232
      %235 = vxpose.xlu0.b32.start [1/16] %v210, 128
      %236 = vxpose.xlu0.b32.cont [2/16] %v212, 128
      %237 = vxpose.xlu0.b32.cont [3/16] %v214, 128
      %238 = vxpose.xlu0.b32.cont [4/16] %v216, 128
      %239 = vxpose.xlu0.b32.cont [5/16] %v218, 128
      %240 = vxpose.xlu0.b32.cont [6/16] %v220, 128
      %241 = vxpose.xlu0.b32.cont [7/16] 0.0, 128
      %242 = vxpose.xlu0.b32.cont [8/16] 0.0, 128
      %243 = vxpose.xlu0.b32.cont [9/16] 0.0, 128
      %244 = vxpose.xlu0.b32.cont [10/16] 0.0, 128
      %245 = vxpose.xlu0.b32.cont [11/16] 0.0, 128
      %246 = vxpose.xlu0.b32.cont [12/16] 0.0, 128
      %247 = vxpose.xlu0.b32.cont [13/16] 0.0, 128
      %248 = vxpose.xlu0.b32.cont [14/16] 0.0, 128
      %249 = vxpose.xlu0.b32.cont [15/16] 0.0, 128
      %250 = vxpose.xlu0.b32.end [16/16] 0.0, 128
      %v251 = vpop.trf.xlu0
      %v252 = vpop.trf.xlu0
      %v253 = vpop.trf.xlu0
      %v254 = vpop.trf.xlu0
      %v255 = vpop.trf.xlu0
      %v256 = vpop.trf.xlu0
      %v257 = vpop.trf.xlu0
      %v258 = vpop.trf.xlu0
      %v259 = vpop.trf.xlu0
      %v260 = vpop.trf.xlu0
      %v261 = vpop.trf.xlu0
      %v262 = vpop.trf.xlu0
      %v263 = vpop.trf.xlu0
      %v264 = vpop.trf.xlu0
      %v265 = vpop.trf.xlu0
      %v266 = vpop.trf.xlu0
      %267 = vxpose.xlu0.b32.start [1/16] %v211, 128
      %268 = vxpose.xlu0.b32.cont [2/16] %v213, 128
      %269 = vxpose.xlu0.b32.cont [3/16] %v215, 128
      %270 = vxpose.xlu0.b32.cont [4/16] %v217, 128
      %271 = vxpose.xlu0.b32.cont [5/16] %v219, 128
      %272 = vxpose.xlu0.b32.cont [6/16] %v221, 128
      %273 = vxpose.xlu0.b32.cont [7/16] 0.0, 128
      %274 = vxpose.xlu0.b32.cont [8/16] 0.0, 128
      %275 = vxpose.xlu0.b32.cont [9/16] 0.0, 128
      %276 = vxpose.xlu0.b32.cont [10/16] 0.0, 128
      %277 = vxpose.xlu0.b32.cont [11/16] 0.0, 128
      %278 = vxpose.xlu0.b32.cont [12/16] 0.0, 128
      %279 = vxpose.xlu0.b32.cont [13/16] 0.0, 128
      %280 = vxpose.xlu0.b32.cont [14/16] 0.0, 128
      %281 = vxpose.xlu0.b32.cont [15/16] 0.0, 128
      %282 = vxpose.xlu0.b32.end [16/16] 0.0, 128
      %v283 = vpop.trf.xlu0
      %v284 = vpop.trf.xlu0
      %v285 = vpop.trf.xlu0
      %v286 = vpop.trf.xlu0
      %v287 = vpop.trf.xlu0
      %v288 = vpop.trf.xlu0
      %v289 = vpop.trf.xlu0
      %v290 = vpop.trf.xlu0
      %v291 = vpop.trf.xlu0
      %v292 = vpop.trf.xlu0
      %v293 = vpop.trf.xlu0
      %v294 = vpop.trf.xlu0
      %v295 = vpop.trf.xlu0
      %v296 = vpop.trf.xlu0
      %v297 = vpop.trf.xlu0
      %v298 = vpop.trf.xlu0
      %vm299 = vcmask 392192
      %v301 = vsel %vm299, %v251, 0
      %v304 = vsel %vm299, %v252, 0
      %v307 = vsel %vm299, %v253, 0
      %v310 = vsel %vm299, %v254, 0
      %v313 = vsel %vm299, %v255, 0
      %v316 = vsel %vm299, %v256, 0
      %v319 = vsel %vm299, %v257, 0
      %v322 = vsel %vm299, %v258, 0
      %v325 = vsel %vm299, %v259, 0
      %v328 = vsel %vm299, %v260, 0
      %v331 = vsel %vm299, %v261, 0
      %v334 = vsel %vm299, %v262, 0
      %v337 = vsel %vm299, %v263, 0
      %v340 = vsel %vm299, %v264, 0
      %v343 = vsel %vm299, %v265, 0
      %v346 = vsel %vm299, %v266, 0
      %v349 = vsel %vm299, %v283, 0
      %v352 = vsel %vm299, %v284, 0
      %v355 = vsel %vm299, %v285, 0
      %v358 = vsel %vm299, %v286, 0
      %v361 = vsel %vm299, %v287, 0
      %v364 = vsel %vm299, %v288, 0
      %v367 = vsel %vm299, %v289, 0
      %v370 = vsel %vm299, %v290, 0
      %v373 = vsel %vm299, %v291, 0
      %v376 = vsel %vm299, %v292, 0
      %v379 = vsel %vm299, %v293, 0
      %v382 = vsel %vm299, %v294, 0
      %v385 = vsel %vm299, %v295, 0
      %v388 = vsel %vm299, %v296, 0
      %v391 = vsel %vm299, %v297, 0
      %v394 = vsel %vm299, %v298, 0
      %396 = vmatprep.subr.mxu0 0.0
      %397 = vmatpush1.msra.mxu0 %v222
      %398 = vmatprep.subr.mxu0 0.0
      %399 = vmatpush1.msra.mxu0 %v223
      %400 = vmatprep.subr.mxu0 0.0
      %401 = vmatpush1.msra.mxu0 %v224
      %402 = vmatprep.subr.mxu0 0.0
      %403 = vmatpush1.msra.mxu0 %v225
      %404 = vmatprep.subr.mxu0 0.0
      %405 = vmatpush1.msra.mxu0 %v226
      %406 = vmatprep.subr.mxu0 0.0
      %407 = vmatpush1.msra.mxu0 %v227
      %408 = vmatprep.subr.mxu0 0.0
      %409 = vmatpush1.msra.mxu0 0.0
      %410 = vmatprep.subr.mxu0 0.0
      %411 = vmatpush1.msra.mxu0 0.0
      %412 = vmatprep.subr.mxu0 0.0
      %413 = vmatpush1.msra.mxu0 0.0
      %414 = vmatprep.subr.mxu0 0.0
      %415 = vmatpush1.msra.mxu0 0.0
      %416 = vmatprep.subr.mxu0 0.0
      %417 = vmatpush1.msra.mxu0 0.0
      %418 = vmatprep.subr.mxu0 0.0
      %419 = vmatpush1.msra.mxu0 0.0
      %420 = vmatprep.subr.mxu0 0.0
      %421 = vmatpush1.msra.mxu0 0.0
      %422 = vmatprep.subr.mxu0 0.0
      %423 = vmatpush1.msra.mxu0 0.0
      %424 = vmatprep.subr.mxu0 0.0
      %425 = vmatpush1.msra.mxu0 0.0
      %426 = vmatprep.subr.mxu0 0.0
      %427 = vmatpush1.msra.mxu0 0.0
      %428 = vmatprep.subr.mxu0 0.0
      %429 = vmatpush1.msra.mxu0 0.0
      %430 = vmatprep.subr.mxu0 0.0
      %431 = vmatpush1.msra.mxu0 0.0
      %432 = vmatprep.subr.mxu0 0.0
      %433 = vmatpush1.msra.mxu0 0.0
      %434 = vmatprep.subr.mxu0 0.0
      %435 = vmatpush1.msra.mxu0 0.0
      %436 = vmatprep.subr.mxu0 0.0
      %437 = vmatpush1.msra.mxu0 0.0
      %438 = vmatprep.subr.mxu0 0.0
      %439 = vmatpush1.msra.mxu0 0.0
      %440 = vmatprep.subr.mxu0 0.0
      %441 = vmatpush1.msra.mxu0 0.0
      %442 = vmatprep.subr.mxu0 0.0
      %443 = vmatpush1.msra.mxu0 0.0
      %444 = vmatprep.subr.mxu0 0.0
      %445 = vmatpush1.msra.mxu0 0.0
      %446 = vmatprep.subr.mxu0 0.0
      %447 = vmatpush1.msra.mxu0 0.0
      %448 = vmatprep.subr.mxu0 0.0
      %449 = vmatpush1.msra.mxu0 0.0
      %450 = vmatprep.subr.mxu0 0.0
      %451 = vmatpush1.msra.mxu0 0.0
      %452 = vmatprep.subr.mxu0 0.0
      %453 = vmatpush1.msra.mxu0 0.0
      %454 = vmatprep.subr.mxu0 0.0
      %455 = vmatpush1.msra.mxu0 0.0
      %456 = vmatprep.subr.mxu0 0.0
      %457 = vmatpush1.msra.mxu0 0.0
      %458 = vmatprep.subr.mxu0 0.0
      %459 = vmatpush1.msra.mxu0 0.0
      %460 = vmatprep.mubr.f32.mxu0 0.0
      %461 = vmatmul.mubr.f32.gmra.mrb[0].mxu0 %v301
      %v462 = vpop.f32.mrb[0].mxu0
      %v463 = vadd.f32 %v233, %v462
      %v464 = vpop.f32.mrb[0].mxu0
      %465 = vmatprep.mubr.f32.mxu0 0.0
      %466 = vmatmul.mubr.f32.gmra.mrb[0].mxu0 %v304
      %v467 = vpop.f32.mrb[0].mxu0
      %v468 = vadd.f32 %v233, %v467
      %v469 = vpop.f32.mrb[0].mxu0
      %470 = vmatprep.mubr.f32.mxu0 0.0
      %471 = vmatmul.mubr.f32.gmra.mrb[0].mxu0 %v307
      %v472 = vpop.f32.mrb[0].mxu0
      %v473 = vadd.f32 %v233, %v472
      %v474 = vpop.f32.mrb[0].mxu0
      %475 = vmatprep.mubr.f32.mxu0 0.0
      %476 = vmatmul.mubr.f32.gmra.mrb[0].mxu0 %v310
      %v477 = vpop.f32.mrb[0].mxu0
      %v478 = vadd.f32 %v233, %v477
      %v479 = vpop.f32.mrb[0].mxu0
      %480 = vmatprep.mubr.f32.mxu0 0.0
      %481 = vmatmul.mubr.f32.gmra.mrb[0].mxu0 %v313
      %v482 = vpop.f32.mrb[0].mxu0
      %v483 = vadd.f32 %v233, %v482
      %v484 = vpop.f32.mrb[0].mxu0
      %485 = vmatprep.mubr.f32.mxu0 0.0
      %486 = vmatmul.mubr.f32.gmra.mrb[0].mxu0 %v316
      %v487 = vpop.f32.mrb[0].mxu0
      %v488 = vadd.f32 %v233, %v487
      %v489 = vpop.f32.mrb[0].mxu0
      %490 = vmatprep.mubr.f32.mxu0 0.0
      %491 = vmatmul.mubr.f32.gmra.mrb[0].mxu0 %v319
      %v492 = vpop.f32.mrb[0].mxu0
      %v493 = vadd.f32 %v233, %v492
      %v494 = vpop.f32.mrb[0].mxu0
      %495 = vmatprep.mubr.f32.mxu0 0.0
      %496 = vmatmul.mubr.f32.gmra.mrb[0].mxu0 %v322
      %v497 = vpop.f32.mrb[0].mxu0
      %v498 = vadd.f32 %v233, %v497
      %v499 = vpop.f32.mrb[0].mxu0
      %500 = vmatprep.mubr.f32.mxu0 0.0
      %501 = vmatmul.mubr.f32.gmra.mrb[0].mxu0 %v325
      %v502 = vpop.f32.mrb[0].mxu0
      %v503 = vadd.f32 %v233, %v502
      %v504 = vpop.f32.mrb[0].mxu0
      %505 = vmatprep.mubr.f32.mxu0 0.0
      %506 = vmatmul.mubr.f32.gmra.mrb[0].mxu0 %v328
      %v507 = vpop.f32.mrb[0].mxu0
      %v508 = vadd.f32 %v233, %v507
      %v509 = vpop.f32.mrb[0].mxu0
      %510 = vmatprep.mubr.f32.mxu0 0.0
      %511 = vmatmul.mubr.f32.gmra.mrb[0].mxu0 %v331
      %v512 = vpop.f32.mrb[0].mxu0
      %v513 = vadd.f32 %v233, %v512
      %v514 = vpop.f32.mrb[0].mxu0
      %515 = vmatprep.mubr.f32.mxu0 0.0
      %516 = vmatmul.mubr.f32.gmra.mrb[0].mxu0 %v334
      %v517 = vpop.f32.mrb[0].mxu0
      %v518 = vadd.f32 %v233, %v517
      %v519 = vpop.f32.mrb[0].mxu0
      %520 = vmatprep.mubr.f32.mxu0 0.0
      %521 = vmatmul.mubr.f32.gmra.mrb[0].mxu0 %v337
      %v522 = vpop.f32.mrb[0].mxu0
      %v523 = vadd.f32 %v233, %v522
      %v524 = vpop.f32.mrb[0].mxu0
      %525 = vmatprep.mubr.f32.mxu0 0.0
      %526 = vmatmul.mubr.f32.gmra.mrb[0].mxu0 %v340
      %v527 = vpop.f32.mrb[0].mxu0
      %v528 = vadd.f32 %v233, %v527
      %v529 = vpop.f32.mrb[0].mxu0
      %530 = vmatprep.mubr.f32.mxu0 0.0
      %531 = vmatmul.mubr.f32.gmra.mrb[0].mxu0 %v343
      %v532 = vpop.f32.mrb[0].mxu0
      %v533 = vadd.f32 %v233, %v532
      %v534 = vpop.f32.mrb[0].mxu0
      %535 = vmatprep.mubr.f32.mxu0 0.0
      %536 = vmatmul.mubr.f32.gmra.mrb[0].mxu0 %v346
      %v537 = vpop.f32.mrb[0].mxu0
      %v538 = vadd.f32 %v233, %v537
      %v539 = vpop.f32.mrb[0].mxu0
      %540 = vmatprep.mubr.f32.mxu0 0.0
      %541 = vmatmul.mubr.f32.gmra.mrb[0].mxu0 %v349
      %v542 = vpop.f32.mrb[0].mxu0
      %v543 = vadd.f32 %v233, %v542
      %v544 = vpop.f32.mrb[0].mxu0
      %545 = vmatprep.mubr.f32.mxu0 0.0
      %546 = vmatmul.mubr.f32.gmra.mrb[0].mxu0 %v352
      %v547 = vpop.f32.mrb[0].mxu0
      %v548 = vadd.f32 %v233, %v547
      %v549 = vpop.f32.mrb[0].mxu0
      %550 = vmatprep.mubr.f32.mxu0 0.0
      %551 = vmatmul.mubr.f32.gmra.mrb[0].mxu0 %v355
      %v552 = vpop.f32.mrb[0].mxu0
      %v553 = vadd.f32 %v233, %v552
      %v554 = vpop.f32.mrb[0].mxu0
      %555 = vmatprep.mubr.f32.mxu0 0.0
      %556 = vmatmul.mubr.f32.gmra.mrb[0].mxu0 %v358
      %v557 = vpop.f32.mrb[0].mxu0
      %v558 = vadd.f32 %v233, %v557
      %v559 = vpop.f32.mrb[0].mxu0
      %560 = vmatprep.mubr.f32.mxu0 0.0
      %561 = vmatmul.mubr.f32.gmra.mrb[0].mxu0 %v361
      %v562 = vpop.f32.mrb[0].mxu0
      %v563 = vadd.f32 %v233, %v562
      %v564 = vpop.f32.mrb[0].mxu0
      %565 = vmatprep.mubr.f32.mxu0 0.0
      %566 = vmatmul.mubr.f32.gmra.mrb[0].mxu0 %v364
      %v567 = vpop.f32.mrb[0].mxu0
      %v568 = vadd.f32 %v233, %v567
      %v569 = vpop.f32.mrb[0].mxu0
      %570 = vmatprep.mubr.f32.mxu0 0.0
      %571 = vmatmul.mubr.f32.gmra.mrb[0].mxu0 %v367
      %v572 = vpop.f32.mrb[0].mxu0
      %v573 = vadd.f32 %v233, %v572
      %v574 = vpop.f32.mrb[0].mxu0
      %575 = vmatprep.mubr.f32.mxu0 0.0
      %576 = vmatmul.mubr.f32.gmra.mrb[0].mxu0 %v370
      %v577 = vpop.f32.mrb[0].mxu0
      %v578 = vadd.f32 %v233, %v577
      %v579 = vpop.f32.mrb[0].mxu0
      %580 = vmatprep.mubr.f32.mxu0 0.0
      %581 = vmatmul.mubr.f32.gmra.mrb[0].mxu0 %v373
      %v582 = vpop.f32.mrb[0].mxu0
      %v583 = vadd.f32 %v233, %v582
      %v584 = vpop.f32.mrb[0].mxu0
      %585 = vmatprep.mubr.f32.mxu0 0.0
      %586 = vmatmul.mubr.f32.gmra.mrb[0].mxu0 %v376
      %v587 = vpop.f32.mrb[0].mxu0
      %v588 = vadd.f32 %v233, %v587
      %v589 = vpop.f32.mrb[0].mxu0
      %590 = vmatprep.mubr.f32.mxu0 0.0
      %591 = vmatmul.mubr.f32.gmra.mrb[0].mxu0 %v379
      %v592 = vpop.f32.mrb[0].mxu0
      %v593 = vadd.f32 %v233, %v592
      %v594 = vpop.f32.mrb[0].mxu0
      %595 = vmatprep.mubr.f32.mxu0 0.0
      %596 = vmatmul.mubr.f32.gmra.mrb[0].mxu0 %v382
      %v597 = vpop.f32.mrb[0].mxu0
      %v598 = vadd.f32 %v233, %v597
      %v599 = vpop.f32.mrb[0].mxu0
      %600 = vmatprep.mubr.f32.mxu0 0.0
      %601 = vmatmul.mubr.f32.gmra.mrb[0].mxu0 %v385
      %v602 = vpop.f32.mrb[0].mxu0
      %v603 = vadd.f32 %v233, %v602
      %v604 = vpop.f32.mrb[0].mxu0
      %605 = vmatprep.mubr.f32.mxu0 0.0
      %606 = vmatmul.mubr.f32.gmra.mrb[0].mxu0 %v388
      %v607 = vpop.f32.mrb[0].mxu0
      %v608 = vadd.f32 %v233, %v607
      %v609 = vpop.f32.mrb[0].mxu0
      %610 = vmatprep.mubr.f32.mxu0 0.0
      %611 = vmatmul.mubr.f32.gmra.mrb[0].mxu0 %v391
      %v612 = vpop.f32.mrb[0].mxu0
      %v613 = vadd.f32 %v233, %v612
      %v614 = vpop.f32.mrb[0].mxu0
      %615 = vmatprep.mubr.f32.mxu0 0.0
      %616 = vmatmul.mubr.f32.gmra.mrb[0].mxu0 %v394
      %v617 = vpop.f32.mrb[0].mxu0
      %v618 = vadd.f32 %v233, %v617
      %v619 = vpop.f32.mrb[0].mxu0
      %620 = vdwg.mxu0
      %621 = vst [vmem:[%s208] sm:$0xff] %v463
      %622 = vst [vmem:[%s208 + $0x8] sm:$0xff] %v468
      %623 = vst [vmem:[%s208 + $0x10] sm:$0xff] %v473
      %624 = vst [vmem:[%s208 + $0x18] sm:$0xff] %v478
      %625 = vst [vmem:[%s208 + $0x20] sm:$0xff] %v483
      %626 = vst [vmem:[%s208 + $0x28] sm:$0xff] %v488
      %627 = vst [vmem:[%s208 + $0x30] sm:$0xff] %v493
      %628 = vst [vmem:[%s208 + $0x38] sm:$0xff] %v498
      %629 = vst [vmem:[%s208 + $0x40] sm:$0xff] %v503
      %630 = vst [vmem:[%s208 + $0x48] sm:$0xff] %v508
      %631 = vst [vmem:[%s208 + $0x50] sm:$0xff] %v513
      %632 = vst [vmem:[%s208 + $0x58] sm:$0xff] %v518
      %633 = vst [vmem:[%s208 + $0x60] sm:$0xff] %v523
      %634 = vst [vmem:[%s208 + $0x68] sm:$0xff] %v528
      %635 = vst [vmem:[%s208 + $0x70] sm:$0xff] %v533
      %636 = vst [vmem:[%s208 + $0x78] sm:$0xff] %v538
      %637 = vst [vmem:[%s208 + $0x80] sm:$0xff] %v543
      %638 = vst [vmem:[%s208 + $0x88] sm:$0xff] %v548
      %639 = vst [vmem:[%s208 + $0x90] sm:$0xff] %v553
      %640 = vst [vmem:[%s208 + $0x98] sm:$0xff] %v558
      %641 = vst [vmem:[%s208 + $0xa0] sm:$0xff] %v563
      %642 = vst [vmem:[%s208 + $0xa8] sm:$0xff] %v568
      %643 = vst [vmem:[%s208 + $0xb0] sm:$0xff] %v573
      %644 = vst [vmem:[%s208 + $0xb8] sm:$0xff] %v578
      %645 = vst [vmem:[%s208 + $0xc0] sm:$0xff] %v583
      %646 = vst [vmem:[%s208 + $0xc8] sm:$0xff] %v588
      %647 = vst [vmem:[%s208 + $0xd0] sm:$0xff] %v593
      %648 = vst [vmem:[%s208 + $0xd8] sm:$0xff] %v598
      %649 = vst [vmem:[%s208 + $0xe0] sm:$0xff] %v603
      %650 = vst [vmem:[%s208 + $0xe8] sm:$0xff] %v608
      %651 = vst [vmem:[%s208 + $0xf0] sm:$0xff] %v613
      %652 = vst [vmem:[%s208 + $0xf8] sm:$0xff] %v618
      %s653 = smul.u32 32, %s19
      %p654 = scmp.lt.s32.totalorder %s18, 1
      %s655 = scalar_select %p654, %s18, 1
      %p656 = scmp.lt.s32.totalorder %s653, 31
      %s657 = scalar_select %p656, %s653, 31
      %s658 = smul.addr %s655, 32
      %s659 = sadd.s32 %s657, %s658
      %s660 = smul.addr %s659, 8
      %s661 = scalar_lea.vmem %s3, %s660
      // Predicated region
      $region33: #{decoupled_head_forward.1} parent=31 // pred_check
        %p662 = pneg %p116
      $region34: #{decoupled_head_forward.1} parent=31 // pred_check_branch
        %664 = sbr.rel (%p662) target = $region36
      $region35: #{decoupled_head_forward.1} parent=31 // pred_region
        %s665 = smul.u32 32, %s19
      $region36: #{decoupled_head_forward.1} parent=31 // pred_fallthru
        _
    $region32: #{decoupled_head_forward.1} parent=5 // pred_fallthru
      _
    %p666 = scmp.le.s32.totalorder 2, %s9
    // Predicated region
    $region37: #{decoupled_head_forward.1} parent=5 // pred_check
      %p667 = pneg %p666
    $region38: #{decoupled_head_forward.1} parent=5 // pred_check_branch
      %669 = sbr.rel (%p667) target = $region40
    $region39: #{decoupled_head_forward.1} parent=5 // pred_region
      %s670 = ssub.s32 %s9, 2
      // Predicated region
      $region41: #{decoupled_head_forward.1} parent=39 // pred_check
        %p671 = pneg %p122
      $region42: #{decoupled_head_forward.1} parent=39 // pred_check_branch
        %673 = sbr.rel (%p671) target = $region44
      $region43: #{decoupled_head_forward.1} parent=39 // pred_region
        %s674 = smul.u32 32, %s21
        %p675 = scmp.lt.s32.totalorder %s20, 1
        %s676 = scalar_select %p675, %s20, 1
        %p677 = scmp.lt.s32.totalorder %s674, 31
        %s678 = scalar_select %p677, %s674, 31
        %s679 = smul.addr %s676, 32
        %s680 = sadd.s32 %s678, %s679
        %s681 = smul.addr %s680, 8
        %s682 = scalar_lea.vmem %s3, %s681
      $region44: #{decoupled_head_forward.1} parent=39 // pred_fallthru
        _
    $region40: #{decoupled_head_forward.1} parent=5 // pred_fallthru
      _
  $region6: #{decoupled_head_forward.1} parent=0 // loop_footer
    %s13 = sadd.s32 1, %s9
  $region7: #{decoupled_head_forward.1} parent=0 // loop_footer_branch
    %8 = sbr.rel target = $region3
  $region8: #{decoupled_head_forward.1} parent=0 // loop_exit
    _

</llo_original>
